<compile_context>
chip_gen: v5e
topology: v5e:2x2
jax: 0.10.0
libtpu: 0.0.40
codegen_flags: <defaults>
</compile_context>

<pallas_src>
import jax
import jax.numpy as jnp
from jax.experimental import pallas as pl
from jax.experimental.pallas import tpu as pltpu


def _cell_reduction_kernel(x_ref, w_ref, o_ref):
    # x_ref: (B_tile, Cin, L)   -- NCL-native input block
    # w_ref: (Cout, 3*Cin)      -- [tap0 | tap1 + w1x1 | tap2] stacked weights
    # o_ref: (B_tile, Cout, L)  -- NCL-native output block
    b_t, cin, L = x_ref.shape
    cout = o_ref.shape[1]

    x = x_ref[...]                                           # (B_t, Cin, L)

    # Halo along the lane axis, zeros injected directly at the boundaries:
    #   x_prev[..., l] = x[..., l-1] (0 at l=0)
    #   x_next[..., l] = x[..., l+1] (0 at l=L-1)
    zero_col = jnp.zeros((b_t, cin, 1), dtype=x.dtype)
    x_prev = jnp.concatenate([zero_col, x[:, :, : L - 1]], axis=2)
    x_next = jnp.concatenate([x[:, :, 1:], zero_col], axis=2)

    # Stack the three shifted views on sublanes -> single contraction dim.
    x_stack = jnp.concatenate([x_prev, x, x_next], axis=1)   # (B_t, 3*Cin, L)

    if b_t == 1:
        # Common tiny-batch-tile case: plain 2D MXU matmul, no batch dim.
        acc = jnp.dot(w_ref[...], x_stack[0],
                      preferred_element_type=jnp.float32)    # (Cout, L)
        o_ref[0] = acc.astype(o_ref.dtype)
    else:
        # One batched MXU matmul over the whole batch tile (no Python unroll).
        w_b = jnp.broadcast_to(w_ref[...], (b_t, cout, 3 * cin))
        acc = jnp.einsum('bok,bkl->bol', w_b, x_stack,
                         preferred_element_type=jnp.float32)  # (B_t, Cout, L)
        o_ref[...] = acc.astype(o_ref.dtype)


def _choose_batch_tile(n, cin, cout, L, itemsize, vmem_budget=8 << 20):
    """Largest divisor of n whose double-buffered in+out block fits the budget,
    while keeping >= 2 grid steps when possible (v7x has 2 TensorCores/chip)."""
    per_elem = 2 * (cin + cout) * L * itemsize
    best = 1
    for bt in range(1, n + 1):
        if n % bt != 0:
            continue
        if bt * per_elem > vmem_budget:
            continue
        if n >= 2 and (n // bt) < 2:
            continue
        best = bt
    return best


def cell_reduction(x_ncl, w3, w1, batch_tile=None):
    """x_ncl: (N, Cin, L) float32; w3: (Cout, Cin, 3); w1: (Cout, Cin, 1)."""
    N, Cin, L = x_ncl.shape
    Cout = w3.shape[0]

    # Weight-side prep (tiny, one-time): fold the 1x1 conv into the center tap
    # and lay taps out as a single (Cout, 3*Cin) matrix matching the
    # [x_prev ; x ; x_next] sublane stacking in the kernel.
    w_taps = jnp.transpose(w3, (2, 0, 1))                      # (3, Cout, Cin)
    w_taps = w_taps.at[1].add(w1[:, :, 0])                     # fold k=1 branch
    w_stack = jnp.concatenate(
        [w_taps[0], w_taps[1], w_taps[2]], axis=1)             # (Cout, 3*Cin)

    if batch_tile is None:
        batch_tile = _choose_batch_tile(
            N, Cin, Cout, L, jnp.dtype(x_ncl.dtype).itemsize)
    grid_n = N // batch_tile

    return pl.pallas_call(
        _cell_reduction_kernel,
        out_shape=jax.ShapeDtypeStruct((N, Cout, L), x_ncl.dtype),
        grid_spec=pltpu.PrefetchScalarGridSpec(
            num_scalar_prefetch=0,
            grid=(grid_n,),
            in_specs=[
                pl.BlockSpec((batch_tile, Cin, L), lambda n: (n, 0, 0)),
                pl.BlockSpec((Cout, 3 * Cin), lambda n: (0, 0)),
            ],
            out_specs=pl.BlockSpec((batch_tile, Cout, L), lambda n: (n, 0, 0)),
        ),
        compiler_params=pltpu.CompilerParams(
            dimension_semantics=("parallel",)),
    )(x_ncl, w_stack)


def _reference(x_ncl, w3, w1):
    # Pure-JAX reference (conv1d k=3 pad=1 + conv1d k=1) for sanity.
    x_pad = jnp.pad(x_ncl, ((0, 0), (0, 0), (1, 1)))
    L = x_ncl.shape[2]
    y3 = sum(
        jnp.einsum('ncl,oc->nol', x_pad[:, :, k:k + L], w3[:, :, k])
        for k in range(3)
    )
    y1 = jnp.einsum('ncl,oc->nol', x_ncl, w1[:, :, 0])
    return y3 + y1


if __name__ == "__main__":
    key = jax.random.PRNGKey(0)
    k_x, k_w3, k_w1 = jax.random.split(key, 3)

    N, Cin, Cout, L = 2, 8, 4, 16
    x = jax.random.normal(k_x, (N, Cin, L), dtype=jnp.float32)
    # Deterministic synthetic weights (Conv1d(8,4,3) and Conv1d(8,4,1)).
    w3 = jax.random.normal(k_w3, (Cout, Cin, 3), dtype=jnp.float32) * 0.1
    w1 = jax.random.normal(k_w1, (Cout, Cin, 1), dtype=jnp.float32) * 0.1

    out = cell_reduction(x, w3, w1)
    out = jax.block_until_ready(out)

    ref = _reference(x, w3, w1)
    assert out.shape == (N, Cout, L), out.shape
    assert jnp.allclose(out, ref, atol=1e-4, rtol=1e-4), "mismatch vs reference"

    print("KERNEL_OK")
</pallas_src>

<mosaic_0001>
module attributes {stable_mosaic.version = 11 : i64} {
  func.func @_cell_reduction_kernel(%arg0: i32, %arg1: memref<1x8x16xf32, #tpu.memory_space<vmem>>, %arg2: memref<4x24xf32, #tpu.memory_space<vmem>>, %arg3: memref<1x4x16xf32, #tpu.memory_space<vmem>>) attributes {dimension_semantics = [#tpu.dimension_semantics<parallel>], iteration_bounds = array<i64: 2>, scalar_prefetch = 0 : i64, scratch_operands = 0 : i64, tpu.core_type = #tpu.core_type<tc>, window_params = [{transform_indices = @transform_0, window_bounds = array<i64: 1, 8, 16>}, {pipeline_mode = #tpu.pipeline_mode<synchronous>, transform_indices = @transform_1, window_bounds = array<i64: 4, 24>}, {transform_indices = @transform_2, window_bounds = array<i64: 1, 4, 16>}]} {
    %c0 = arith.constant 0 : index
    %c0_0 = arith.constant 0 : index
    %c0_1 = arith.constant 0 : index
    %0 = vector.load %arg1[%c0, %c0_0, %c0_1] : memref<1x8x16xf32, #tpu.memory_space<vmem>>, vector<1x8x16xf32>
    %cst = arith.constant 0.000000e+00 : f32
    %1 = vector.broadcast %cst : f32 to vector<1x8x1xf32>
    %2 = vector.extract_strided_slice %0 {offsets = [0, 0, 0], sizes = [1, 8, 15], strides = [1, 1, 1]} : vector<1x8x16xf32> to vector<1x8x15xf32>
    %3 = tpu.concatenate %1, %2 in 2 : vector<1x8x1xf32>, vector<1x8x15xf32> -> vector<1x8x16xf32>
    %4 = vector.extract_strided_slice %0 {offsets = [0, 0, 1], sizes = [1, 8, 15], strides = [1, 1, 1]} : vector<1x8x16xf32> to vector<1x8x15xf32>
    %5 = tpu.concatenate %4, %1 in 2 : vector<1x8x15xf32>, vector<1x8x1xf32> -> vector<1x8x16xf32>
    %6 = tpu.concatenate %3, %0, %5 in 1 : vector<1x8x16xf32>, vector<1x8x16xf32>, vector<1x8x16xf32> -> vector<1x24x16xf32>
    %c0_2 = arith.constant 0 : index
    %c0_3 = arith.constant 0 : index
    %7 = vector.load %arg2[%c0_2, %c0_3] : memref<4x24xf32, #tpu.memory_space<vmem>>, vector<4x24xf32>
    %8 = vector.shape_cast %6 : vector<1x24x16xf32> to vector<24x16xf32>
    %cst_4 = arith.constant dense<0.000000e+00> : vector<4x16xf32>
    %9 = tpu.matmul %7, %8, %cst_4 {dimension_numbers = #tpu.dot_dimension_numbers<[1], [0], [0], [1], [0, 0, 1, 1], [], []>} : vector<4x24xf32>, vector<24x16xf32>, vector<4x16xf32> -> vector<4x16xf32>
    %c0_5 = arith.constant 0 : index
    %c0_6 = arith.constant 0 : index
    %c0_7 = arith.constant 0 : index
    %10 = vector.load %arg3[%c0_5, %c0_6, %c0_7] : memref<1x4x16xf32, #tpu.memory_space<vmem>>, vector<1x4x16xf32>
    %11 = vector.shape_cast %10 : vector<1x4x16xf32> to vector<4x16xf32>
    %12 = vector.shape_cast %9 : vector<4x16xf32> to vector<1x4x16xf32>
    tpu.vector_store %arg3[%c0_5, %c0_6, %c0_7], %12 {strides = array<i32>} : memref<1x4x16xf32, #tpu.memory_space<vmem>>, vector<1x4x16xf32>,
    return
  }
  func.func @transform_0(%arg0: i32) -> (i32, i32, i32) {
    %c0_i32 = arith.constant 0 : i32
    %c0_i32_0 = arith.constant 0 : i32
    %c0_i32_1 = arith.constant 0 : i32
    return %arg0, %c0_i32, %c0_i32_0 : i32, i32, i32
  }
  func.func @transform_1(%arg0: i32) -> (i32, i32) {
    %c0_i32 = arith.constant 0 : i32
    %c0_i32_0 = arith.constant 0 : i32
    %c0_i32_1 = arith.constant 0 : i32
    return %c0_i32, %c0_i32_0 : i32, i32
  }
  func.func @transform_2(%arg0: i32) -> (i32, i32, i32) {
    %c0_i32 = arith.constant 0 : i32
    %c0_i32_0 = arith.constant 0 : i32
    %c0_i32_1 = arith.constant 0 : i32
    return %arg0, %c0_i32, %c0_i32_0 : i32, i32, i32
  }
}

</mosaic_0001>

<llo_original>
// kernel: tpu_custom_call.1
$region0: #{tpu_custom_call.1}
  #allocation0 [shape = 'u32[]', space=smem, size = 0x4, offset = 0x4, fixed_abs, tag = 'smem constant byte address 0x4 - core index']
  #allocation1 [shape = 'u32[72,128]{1,0:T(1,128)}', space=vmem, size = 0x9000, scoped, tag = 'internal scratch']
  %s0 = inlined_call_operand.hbm [shape: f32[2,8,16], index: 0, kind: input, shape index: {}]
  %s1 = inlined_call_operand.hbm [shape: f32[4,24], index: 1, kind: input, shape index: {}]
  %s2 = inlined_call_operand.hbm [shape: f32[2,4,16], index: 2, kind: output, shape index: {}]
  %s3 = sld [smem:[#allocation0]]
  $region49: #{tpu_custom_call.1} parent=0
    _
  %s5 = ssub.s32 1, %s3
  %s6 = scalar_select 0, %s5, %s3
  $region1: #{tpu_custom_call.1} parent=0
    #allocation2 [shape = 'u8[8192]{0}', space=vmem, size = 0x2000, scoped, tag = 'input window, operand 0']
    #allocation3 [shape = 's32[2]{0}', space=sflag, size = 0x8, scoped, tag = 'scoped memory for tpu_custom_call.1']
    #allocation4 [shape = 's32[2]{0}', space=sflag, size = 0x8, scoped, tag = 'scoped memory for tpu_custom_call.1']
    #allocation5 [shape = 'u8[2048]{0}', space=vmem, size = 0x800, scoped, tag = 'input window, operand 1, single buffered']
    #allocation6 [shape = 's32[1]{0}', space=sflag, size = 0x4, scoped, tag = 'scoped memory for tpu_custom_call.1']
    #allocation7 [shape = 'u8[4096]{0}', space=vmem, size = 0x1000, scoped, tag = 'output window, operand 0']
    %7 = vsyncpa [#allocation3], 0
    %s8 = scalar_lea.sflag [#allocation3], 1
    %9 = vsyncpa %s8, 0
    %10 = vsyncpa [#allocation6], 0
    %11 = vsyncpa [#allocation4], 0
    %s12 = scalar_lea.sflag [#allocation4], 1
    %13 = vsyncpa %s12, 0
    loop: start=0, step=1, limit=4
    $region2: #{tpu_custom_call.1} parent=1 // loop_pre_header
      _
    $region3: #{tpu_custom_call.1} parent=1 // loop_header
      %s15 = sphi 0, %s19
      %p16 = scmp.ge.s32.totalorder %s15, 4
      %s25 = sphi 0, %s27
      %s28 = sphi 0, %s25
      %s29 = sphi 0, %s28
      %s45 = sphi 0, %s29
      %s49 = sphi 0, %s49
      %s51 = sphi 0, %s49
      %s52 = sphi 0, %s51
      %s66 = sphi 0, %s52
      %s72 = sphi 0, %s74
      %s75 = sphi 0, %s72
      %s76 = sphi 0, %s75
      %s92 = sphi 0, %s76
    $region4: #{tpu_custom_call.1} parent=1 // loop_header_branch
      %18 = sbr.rel (%p16) target = $region8
    $region5: #{tpu_custom_call.1} parent=1 // loop_body
      %s20 = ssub.s32 %s15, 1
      %s21 = ssub.s32 %s15, 2
      %s22 = sadd.s32 %s15, 1
      %s23 = ssub.s32 %s15, %s22
      %p24 = scmp.eq.s32.totalorder %s23, 0
      %s26 = sadd.s32 %s25, 1
      %s27 = scalar_select %p24, %s25, %s26
      %p30 = pneg %p24
      %p31 = scmp.eq.s32.totalorder %s15, 1
      %p32 = por %p30, %p31
      %p33 = scmp.ne.s32.totalorder %s25, %s28
      %p34 = scmp.eq.s32.totalorder %s15, 0
      %p35 = por %p33, %p34
      %p36 = scmp.ne.s32.totalorder %s25, %s28
      %p37 = scmp.eq.s32.totalorder %s20, 1
      %p38 = por %p36, %p37
      %p39 = scmp.ne.s32.totalorder %s28, %s29
      %p40 = scmp.eq.s32.totalorder %s20, 0
      %p41 = por %p39, %p40
      %p42 = scmp.ne.s32.totalorder %s28, %s29
      %p43 = scmp.eq.s32.totalorder %s21, 1
      %p44 = por %p42, %p43
      %p46 = scmp.ne.s32.totalorder %s29, %s45
      %p47 = scmp.eq.s32.totalorder %s21, 0
      %p48 = por %p46, %p47
      %s50 = sadd.s32 %s49, 1
      %p53 = scmp.eq.s32.totalorder %s15, 1
      %p54 = scmp.ne.s32.totalorder %s49, %s51
      %p55 = scmp.eq.s32.totalorder %s15, 0
      %p56 = por %p54, %p55
      %p57 = scmp.ne.s32.totalorder %s49, %s51
      %p58 = scmp.eq.s32.totalorder %s20, 1
      %p59 = por %p57, %p58
      %p60 = scmp.ne.s32.totalorder %s51, %s52
      %p61 = scmp.eq.s32.totalorder %s20, 0
      %p62 = por %p60, %p61
      %p63 = scmp.ne.s32.totalorder %s51, %s52
      %p64 = scmp.eq.s32.totalorder %s21, 1
      %p65 = por %p63, %p64
      %p67 = scmp.ne.s32.totalorder %s52, %s66
      %p68 = scmp.eq.s32.totalorder %s21, 0
      %p69 = por %p67, %p68
      %s70 = ssub.s32 %s15, %s22
      %p71 = scmp.eq.s32.totalorder %s70, 0
      %s73 = sadd.s32 %s72, 1
      %s74 = scalar_select %p71, %s72, %s73
      %p77 = pneg %p71
      %p78 = scmp.eq.s32.totalorder %s15, 1
      %p79 = por %p77, %p78
      %p80 = scmp.ne.s32.totalorder %s72, %s75
      %p81 = scmp.eq.s32.totalorder %s15, 0
      %p82 = por %p80, %p81
      %p83 = scmp.ne.s32.totalorder %s72, %s75
      %p84 = scmp.eq.s32.totalorder %s20, 1
      %p85 = por %p83, %p84
      %p86 = scmp.ne.s32.totalorder %s75, %s76
      %p87 = scmp.eq.s32.totalorder %s20, 0
      %p88 = por %p86, %p87
      %p89 = scmp.ne.s32.totalorder %s75, %s76
      %p90 = scmp.eq.s32.totalorder %s21, 1
      %p91 = por %p89, %p90
      %p93 = scmp.ne.s32.totalorder %s76, %s92
      %p94 = scmp.eq.s32.totalorder %s21, 0
      %p95 = por %p93, %p94
      %p96 = scmp.le.s32.totalorder 1, %s15
      %p97 = scmp.lt.s32.totalorder %s15, 3
      %p98 = pnand %p96, %p97
      %p99 = pneg %p98
      // Predicated region
      $region9: #{tpu_custom_call.1} parent=5 // pred_check
        _
      $region10: #{tpu_custom_call.1} parent=5 // pred_check_branch
        %101 = sbr.rel (%p98) target = $region12
      $region11: #{tpu_custom_call.1} parent=5 // pred_region
        %s102 = ssub.s32 %s15, 1
        // Predicated region
        $region13: #{tpu_custom_call.1} parent=11 // pred_check
          %p103 = pneg %p62
        $region14: #{tpu_custom_call.1} parent=11 // pred_check_branch
          %105 = sbr.rel (%p103) target = $region16
        $region15: #{tpu_custom_call.1} parent=11 // pred_region
          %107 = vsyncadd [#allocation6], 0
          %s109 = sshll.u32 %s1, 4
          %s110 = int_to_ptr.hbm [resolvable:$true] %s109
          %s111 = sshll.u32 [#allocation5], 4
          %s112 = int_to_ptr.vmem [resolvable:$true] %s111
          %114 = dma.hbm_to_vmem [thread:$0]  %s110, 64, %s112, [#allocation6]
        $region16: #{tpu_custom_call.1} parent=11 // pred_fallthru
          _
      $region12: #{tpu_custom_call.1} parent=5 // pred_fallthru
        _
      %p115 = scmp.lt.s32.totalorder %s15, 2
      // Predicated region
      $region17: #{tpu_custom_call.1} parent=5 // pred_check
        %p116 = pneg %p115
      $region18: #{tpu_custom_call.1} parent=5 // pred_check_branch
        %118 = sbr.rel (%p116) target = $region20
      $region19: #{tpu_custom_call.1} parent=5 // pred_region
        // Predicated region
        $region21: #{tpu_custom_call.1} parent=19 // pred_check
          %p119 = pneg %p35
        $region22: #{tpu_custom_call.1} parent=19 // pred_check_branch
          %121 = sbr.rel (%p119) target = $region24
        $region23: #{tpu_custom_call.1} parent=19 // pred_region
          %s122 = sand.u32 %s25, 1
          %s123 = scalar_lea.sflag [#allocation3], %s122
          %s124 = sand.u32 %s25, 1
          %s125 = smul.addr %s124, 8
          %s126 = scalar_lea.vmem [#allocation2], %s125
          %128 = vsyncadd %s123, 0
          %s129 = smul.addr %s15, 8
          %s130 = scalar_lea.hbm %s0, %s129
          %s132 = sshll.u32 %s130, 4
          %s133 = int_to_ptr.hbm [resolvable:$true] %s132
          %s134 = sshll.u32 %s126, 4
          %s135 = int_to_ptr.vmem [resolvable:$true] %s134
          %137 = dma.hbm_to_vmem [thread:$0]  %s133, 128, %s135, %s123
        $region24: #{tpu_custom_call.1} parent=19 // pred_fallthru
          _
      $region20: #{tpu_custom_call.1} parent=5 // pred_fallthru
        _
      %p138 = scmp.le.s32.totalorder 1, %s15
      %p139 = scmp.lt.s32.totalorder %s15, 3
      %p140 = pnand %p138, %p139
      %p141 = pneg %p140
      // Predicated region
      $region25: #{tpu_custom_call.1} parent=5 // pred_check
        _
      $region26: #{tpu_custom_call.1} parent=5 // pred_check_branch
        %143 = sbr.rel (%p140) target = $region28
      $region27: #{tpu_custom_call.1} parent=5 // pred_region
        %s144 = ssub.s32 %s15, 1
        %s145 = sand.u32 %s28, 1
        %s146 = scalar_lea.sflag [#allocation3], %s145
        %s147 = sand.u32 %s28, 1
        %s148 = smul.addr %s147, 8
        %s149 = scalar_lea.vmem [#allocation2], %s148
        // Predicated region
        $region29: #{tpu_custom_call.1} parent=27 // pred_check
          %p150 = pneg %p41
        $region30: #{tpu_custom_call.1} parent=27 // pred_check_branch
          %152 = sbr.rel (%p150) target = $region32
        $region31: #{tpu_custom_call.1} parent=27 // pred_region
          %154 = dma.done %s146, 128
        $region32: #{tpu_custom_call.1} parent=27 // pred_fallthru
          _
        // Predicated region
        $region33: #{tpu_custom_call.1} parent=27 // pred_check
          %p155 = pneg %p62
        $region34: #{tpu_custom_call.1} parent=27 // pred_check_branch
          %157 = sbr.rel (%p155) target = $region36
        $region35: #{tpu_custom_call.1} parent=27 // pred_region
          %159 = dma.done [#allocation6], 64
        $region36: #{tpu_custom_call.1} parent=27 // pred_fallthru
          _
        %s160 = sand.u32 %s28, 1
        %s161 = scalar_lea.sflag [#allocation3], %s160
        %s162 = sand.u32 %s28, 1
        %s163 = smul.addr %s162, 8
        %s164 = scalar_lea.vmem [#allocation2], %s163
        %p165 = pneg %p41
        %p166 = pneg %p38
        %p167 = pneg %p62
        %p168 = pneg %p59
        %p169 = pneg %p88
        %p170 = pneg %p85
        %s171 = sand.u32 %s75, 1
        %s172 = scalar_lea.sflag [#allocation4], %s171
        %s173 = sand.u32 %s75, 1
        %s174 = smul.addr %s173, 4
        %s175 = scalar_lea.vmem [#allocation7], %s174
        %v176 = vld [vmem:[%s149] sm:$0xff]
        %178 = vrot.lane.b32.xlu0 %v176, 1
        %v179 = vpop.permute.xlu0 %178
        %vm181 = vcmask 7168
        %v182 = vsel %vm181, 0.0, %v179
        %183 = vrot.lane.b32.xlu0 %v176, 127
        %v184 = vpop.permute.xlu0 %183
        %vm186 = vcmask 121856
        %v187 = vsel %vm186, %v184, 0.0
        %v188 = vld [vmem:[#allocation5] sm:$0xf]
        %vm189 = vcmask 195584
        %v191 = vsel %vm189, %v188, 0
        %193 = vmatpush.msra.mxu0 0.0
        %194 = vmatpush.msra.mxu0 0.0
        %195 = vmatpush.msra.mxu0 0.0
        %196 = vmatpush.msra.mxu0 0.0
        %197 = vmatpush.msra.mxu0 0.0
        %198 = vmatpush.msra.mxu0 0.0
        %199 = vmatpush.msra.mxu0 0.0
        %200 = vmatpush.msra.mxu0 0.0
        %201 = vmatpush.msra.mxu0 0.0
        %202 = vmatpush.msra.mxu0 0.0
        %203 = vmatpush.msra.mxu0 0.0
        %204 = vmatpush.msra.mxu0 0.0
        %205 = vmatpush.msra.mxu0 0.0
        %206 = vmatpush.msra.mxu0 %v187
        %207 = vmatpush.msra.mxu0 %v176
        %208 = vmatpush.msra.mxu0 %v182
        %209 = vmatmul.f32.gmra.mxu0 %v191
        %v210 = vpop.f32.mrf.mxu0
        %v211 = vadd.f32 0.0, %v210
        %212 = vdwg.mxu0
        %vm213 = vcmask 125952
        %214 = vst.msk [vmem:[%s175] sm:$0xf] %vm213, %v211
        %s215 = sand.u32 %s75, 1
        %s216 = scalar_lea.sflag [#allocation4], %s215
        %s217 = sand.u32 %s75, 1
        %s218 = smul.addr %s217, 4
        %s219 = scalar_lea.vmem [#allocation7], %s218
        // Predicated region
        $region37: #{tpu_custom_call.1} parent=27 // pred_check
          %p220 = pneg %p85
        $region38: #{tpu_custom_call.1} parent=27 // pred_check_branch
          %222 = sbr.rel (%p220) target = $region40
        $region39: #{tpu_custom_call.1} parent=27 // pred_region
          %224 = vsyncadd %s216, 0
          %s225 = smul.addr %s20, 4
          %s226 = scalar_lea.hbm %s2, %s225
          %s228 = sshll.u32 %s219, 4
          %s229 = int_to_ptr.vmem [resolvable:$true] %s228
          %s230 = sshll.u32 %s226, 4
          %s231 = int_to_ptr.hbm [resolvable:$true] %s230
          %233 = dma.vmem_to_hbm [thread:$0]  %s229, 64, %s231, %s216
        $region40: #{tpu_custom_call.1} parent=27 // pred_fallthru
          _
      $region28: #{tpu_custom_call.1} parent=5 // pred_fallthru
        _
      %p234 = scmp.le.s32.totalorder 2, %s15
      // Predicated region
      $region41: #{tpu_custom_call.1} parent=5 // pred_check
        %p235 = pneg %p234
      $region42: #{tpu_custom_call.1} parent=5 // pred_check_branch
        %237 = sbr.rel (%p235) target = $region44
      $region43: #{tpu_custom_call.1} parent=5 // pred_region
        %s238 = ssub.s32 %s15, 2
        // Predicated region
        $region45: #{tpu_custom_call.1} parent=43 // pred_check
          %p239 = pneg %p91
        $region46: #{tpu_custom_call.1} parent=43 // pred_check_branch
          %241 = sbr.rel (%p239) target = $region48
        $region47: #{tpu_custom_call.1} parent=43 // pred_region
          %s242 = sand.u32 %s76, 1
          %s243 = scalar_lea.sflag [#allocation4], %s242
          %s244 = sand.u32 %s76, 1
          %s245 = smul.addr %s244, 4
          %s246 = scalar_lea.vmem [#allocation7], %s245
          %248 = dma.done %s243, 64
        $region48: #{tpu_custom_call.1} parent=43 // pred_fallthru
          _
      $region44: #{tpu_custom_call.1} parent=5 // pred_fallthru
        _
    $region6: #{tpu_custom_call.1} parent=1 // loop_footer
      %s19 = sadd.s32 1, %s15
    $region7: #{tpu_custom_call.1} parent=1 // loop_footer_branch
      %14 = sbr.rel target = $region3
    $region8: #{tpu_custom_call.1} parent=1 // loop_exit
      _
    %249 = vsyncpa [#allocation3], 1
    %s250 = scalar_lea.sflag [#allocation3], 1
    %251 = vsyncpa %s250, 1
    %252 = vsyncpa [#allocation6], 1
    %253 = vsyncpa [#allocation4], 1
    %s254 = scalar_lea.sflag [#allocation4], 1
    %255 = vsyncpa %s254, 1

</llo_original>
